<compile_context>
chip_gen: v7x
topology: tpu7x:2x2x1
jax: 0.10.0
libtpu: 0.0.40
codegen_flags: <defaults>
</compile_context>

<pallas_src>
import math

import jax
import jax.numpy as jnp
from jax.experimental import pallas as pl
from jax.experimental.pallas import tpu as pltpu


# ----------------------------- model configuration ---------------------------------
IN_CHANNELS = 5
KERNEL_SIZE = 5
POOL_SIZE = 2
WEEKS = 30

O1 = 2 * IN_CHANNELS                      # conv1 out channels = 10
O2 = 3 * IN_CHANNELS                      # conv2 out channels = 15
L0 = WEEKS                                # 30
L1 = L0 - (KERNEL_SIZE - 1)               # 26
P1 = L1 // POOL_SIZE                      # 13
L2 = P1 - (KERNEL_SIZE - 1)               # 9
P2 = L2 // POOL_SIZE                      # 4   (trailing odd conv position dropped)
FLAT = O2 * P2                            # 60
H1 = FLAT // 2                            # 30
H2 = 10
OUT = 2
OUT_PAD = 128                             # lane-dense padded output width

IN_DIM = L0 * IN_CHANNELS                 # 150
C1_DIM = P1 * O1                          # 130
C2_DIM = P2 * O2                          # 60


# ----------------------------------- kernel ----------------------------------------
def _model_kernel(x_ref, w1e_ref, w1o_ref, b1_ref, w2e_ref, w2o_ref, b2_ref,
                  fw1_ref, fb1_ref, fw2_ref, fb2_ref, fw3_ref, fb3_ref, out_ref):
    x = x_ref[...]                                                    # (TB, 150)

    # conv1 at even / odd positions -> relu -> maxpool(2) == elementwise max
    ye = jnp.maximum(jnp.dot(x, w1e_ref[...], preferred_element_type=jnp.float32)
                     + b1_ref[...], 0.0)
    yo = jnp.maximum(jnp.dot(x, w1o_ref[...], preferred_element_type=jnp.float32)
                     + b1_ref[...], 0.0)
    p1 = jnp.maximum(ye, yo)                                          # (TB, 130)

    # conv2 at even / odd positions -> relu -> maxpool(2)
    ze = jnp.maximum(jnp.dot(p1, w2e_ref[...], preferred_element_type=jnp.float32)
                     + b2_ref[...], 0.0)
    zo = jnp.maximum(jnp.dot(p1, w2o_ref[...], preferred_element_type=jnp.float32)
                     + b2_ref[...], 0.0)
    p2 = jnp.maximum(ze, zo)                                          # (TB, 60)

    # fc1 + relu, fc2 + relu, fc3 (lane-padded to 128-wide output)
    h = jnp.maximum(jnp.dot(p2, fw1_ref[...], preferred_element_type=jnp.float32)
                    + fb1_ref[...], 0.0)                              # (TB, 30)
    h = jnp.maximum(jnp.dot(h, fw2_ref[...], preferred_element_type=jnp.float32)
                    + fb2_ref[...], 0.0)                              # (TB, 10)
    out_ref[...] = (jnp.dot(h, fw3_ref[...], preferred_element_type=jnp.float32)
                    + fb3_ref[...]).astype(out_ref.dtype)             # (TB, 128)


# -------------------------- wrapper-side weight re-layout ---------------------------
def _conv_unfold(w, positions, l_in):
    """Block-Toeplitz unfolded conv weight.

    w: (O, Cin, K) PyTorch Conv1d weight.
    positions: conv output positions to evaluate.
    Returns (l_in*Cin, len(positions)*O) with
      W[(pos_p + k)*Cin + c, p*O + o] = w[o, c, k]
    so that a (B, l_in*Cin) position-major activation @ W gives the conv output
    at exactly those positions, position-major along lanes.
    """
    O, Cin, K = w.shape
    w_kc_o = jnp.transpose(w, (2, 1, 0)).reshape(K * Cin, O)   # rows: k*Cin + c
    cols = []
    for pos in positions:
        top = jnp.zeros((pos * Cin, O), w.dtype)
        bot = jnp.zeros(((l_in - pos - K) * Cin, O), w.dtype)
        cols.append(jnp.concatenate([top, w_kc_o, bot], axis=0))
    return jnp.concatenate(cols, axis=1)


# ----------------------------------- wrapper ----------------------------------------
def my_model_forward(x, params, *, tb=512):
    """x: (B, Cin, L) float32, PyTorch NCL layout.  Returns (B, 2) float32."""
    (w1, b1, w2, b2, f1w, f1b, f2w, f2b, f3w, f3b) = params
    B = x.shape[0]

    # conv1 / conv2 unfolded weights for even & odd output positions
    w1e = _conv_unfold(w1, [2 * j for j in range(P1)], L0)        # (150, 130)
    w1o = _conv_unfold(w1, [2 * j + 1 for j in range(P1)], L0)    # (150, 130)
    b1u = jnp.tile(b1, P1).reshape(1, C1_DIM)
    w2e = _conv_unfold(w2, [2 * j for j in range(P2)], P1)        # (130, 60)
    w2o = _conv_unfold(w2, [2 * j + 1 for j in range(P2)], P1)    # (130, 60)
    b2u = jnp.tile(b2, P2).reshape(1, C2_DIM)

    # fc1: kernel activation layout is position-major (l*O2 + c); PyTorch flatten
    # order is channel-major (c*P2 + l) -> fold the permutation into the weight.
    fw1u = jnp.transpose(f1w.reshape(H1, O2, P2), (2, 1, 0)).reshape(C2_DIM, H1)
    fb1u = f1b.reshape(1, H1)
    fw2t = f2w.T                                                  # (30, 10)
    fb2u = f2b.reshape(1, H2)
    # fc3 padded to a lane-dense 128-wide output slab
    fw3p = jnp.zeros((H2, OUT_PAD), f3w.dtype).at[:, :OUT].set(f3w.T)
    fb3p = jnp.zeros((1, OUT_PAD), f3b.dtype).at[:, :OUT].set(f3b.reshape(1, OUT))

    # activation layout: (B, L0*Cin), position-major along lanes
    x_flat = jnp.transpose(x, (0, 2, 1)).reshape(B, IN_DIM)

    # batch tiling (sublane dim must be a multiple of 8 for f32)
    TB = tb if B >= tb else max(8, ((B + 7) // 8) * 8)
    nblk = (B + TB - 1) // TB
    B_pad = nblk * TB
    if B_pad != B:
        x_flat = jnp.pad(x_flat, ((0, B_pad - B), (0, 0)))

    const2 = lambda i: (0, 0)
    full = lambda a: pl.BlockSpec(a.shape, const2)   # weights stay VMEM-resident

    out = pl.pallas_call(
        _model_kernel,
        out_shape=jax.ShapeDtypeStruct((B_pad, OUT_PAD), jnp.float32),
        grid=(nblk,),
        in_specs=[pl.BlockSpec((TB, IN_DIM), lambda i: (i, 0)),
                  full(w1e), full(w1o), full(b1u),
                  full(w2e), full(w2o), full(b2u),
                  full(fw1u), full(fb1u), full(fw2t), full(fb2u),
                  full(fw3p), full(fb3p)],
        out_specs=pl.BlockSpec((TB, OUT_PAD), lambda i: (i, 0)),
        compiler_params=pltpu.CompilerParams(
            dimension_semantics=("parallel",)),
    )(x_flat, w1e, w1o, b1u, w2e, w2o, b2u, fw1u, fb1u, fw2t, fb2u, fw3p, fb3p)

    return out[:B, :OUT]


# ------------------------------ pure-JAX reference ----------------------------------
def _ref_forward(x, params):
    (w1, b1, w2, b2, f1w, f1b, f2w, f2b, f3w, f3b) = params

    def conv1d(x, w, b):
        Bn, Cin, L = x.shape
        O, _, K = w.shape
        Lout = L - K + 1
        out = jnp.zeros((Bn, O, Lout), jnp.float32)
        for k in range(K):
            out = out + jnp.einsum('bcl,oc->bol', x[:, :, k:k + Lout], w[:, :, k])
        return out + b[None, :, None]

    def pool(x):
        Bn, C, L = x.shape
        Lp = L // POOL_SIZE
        return x[:, :, :Lp * POOL_SIZE].reshape(Bn, C, Lp, POOL_SIZE).max(axis=-1)

    h = pool(jax.nn.relu(conv1d(x, w1, b1)))
    h = pool(jax.nn.relu(conv1d(h, w2, b2)))
    h = h.reshape(h.shape[0], -1)
    h = jax.nn.relu(h @ f1w.T + f1b)
    h = jax.nn.relu(h @ f2w.T + f2b)
    return h @ f3w.T + f3b


# --------------------------------------- main ---------------------------------------
if __name__ == "__main__":
    key = jax.random.PRNGKey(0)
    keys = jax.random.split(key, 11)

    B = 4
    x = jax.random.normal(keys[0], (B, IN_CHANNELS, WEEKS), jnp.float32)

    # deterministic synthetic parameters (PyTorch-native shapes)
    def u(k, shape, fan_in):
        bound = 1.0 / math.sqrt(fan_in)
        return jax.random.uniform(k, shape, jnp.float32, -bound, bound)

    params = (
        u(keys[1], (O1, IN_CHANNELS, KERNEL_SIZE), IN_CHANNELS * KERNEL_SIZE),  # conv1.weight
        u(keys[2], (O1,), IN_CHANNELS * KERNEL_SIZE),                           # conv1.bias
        u(keys[3], (O2, O1, KERNEL_SIZE), O1 * KERNEL_SIZE),                    # conv2.weight
        u(keys[4], (O2,), O1 * KERNEL_SIZE),                                    # conv2.bias
        u(keys[5], (H1, FLAT), FLAT),                                           # fc1.weight
        u(keys[6], (H1,), FLAT),                                                # fc1.bias
        u(keys[7], (H2, H1), H1),                                               # fc2.weight
        u(keys[8], (H2,), H1),                                                  # fc2.bias
        u(keys[9], (OUT, H2), H2),                                              # fc3.weight
        u(keys[10], (OUT,), H2),                                                # fc3.bias
    )

    out = my_model_forward(x, params)
    out = jax.block_until_ready(out)

    ref = _ref_forward(x, params)
    assert out.shape == (B, OUT), out.shape
    assert jnp.allclose(out, ref, atol=1e-4, rtol=1e-4), (out, ref)

    print("KERNEL_OK")
</pallas_src>

<mosaic_0001>
module attributes {stable_mosaic.version = 11 : i64} {
  func.func @_model_kernel(%arg0: i32, %arg1: memref<8x150xf32, #tpu.memory_space<vmem>>, %arg2: memref<150x130xf32, #tpu.memory_space<vmem>>, %arg3: memref<150x130xf32, #tpu.memory_space<vmem>>, %arg4: memref<1x130xf32, #tpu.memory_space<vmem>>, %arg5: memref<130x60xf32, #tpu.memory_space<vmem>>, %arg6: memref<130x60xf32, #tpu.memory_space<vmem>>, %arg7: memref<1x60xf32, #tpu.memory_space<vmem>>, %arg8: memref<60x30xf32, #tpu.memory_space<vmem>>, %arg9: memref<1x30xf32, #tpu.memory_space<vmem>>, %arg10: memref<30x10xf32, #tpu.memory_space<vmem>>, %arg11: memref<1x10xf32, #tpu.memory_space<vmem>>, %arg12: memref<10x128xf32, #tpu.memory_space<vmem>>, %arg13: memref<1x128xf32, #tpu.memory_space<vmem>>, %arg14: memref<8x128xf32, #tpu.memory_space<vmem>>) attributes {dimension_semantics = [#tpu.dimension_semantics<parallel>], iteration_bounds = array<i64: 1>, scalar_prefetch = 0 : i64, scratch_operands = 0 : i64, tpu.core_type = #tpu.core_type<tc>, window_params = [{transform_indices = @transform_0, window_bounds = array<i64: 8, 150>}, {pipeline_mode = #tpu.pipeline_mode<synchronous>, transform_indices = @transform_1, window_bounds = array<i64: 150, 130>}, {pipeline_mode = #tpu.pipeline_mode<synchronous>, transform_indices = @transform_2, window_bounds = array<i64: 150, 130>}, {pipeline_mode = #tpu.pipeline_mode<synchronous>, transform_indices = @transform_3, window_bounds = array<i64: 1, 130>}, {pipeline_mode = #tpu.pipeline_mode<synchronous>, transform_indices = @transform_4, window_bounds = array<i64: 130, 60>}, {pipeline_mode = #tpu.pipeline_mode<synchronous>, transform_indices = @transform_5, window_bounds = array<i64: 130, 60>}, {pipeline_mode = #tpu.pipeline_mode<synchronous>, transform_indices = @transform_6, window_bounds = array<i64: 1, 60>}, {pipeline_mode = #tpu.pipeline_mode<synchronous>, transform_indices = @transform_7, window_bounds = array<i64: 60, 30>}, {pipeline_mode = #tpu.pipeline_mode<synchronous>, transform_indices = @transform_8, window_bounds = array<i64: 1, 30>}, {pipeline_mode = #tpu.pipeline_mode<synchronous>, transform_indices = @transform_9, window_bounds = array<i64: 30, 10>}, {pipeline_mode = #tpu.pipeline_mode<synchronous>, transform_indices = @transform_10, window_bounds = array<i64: 1, 10>}, {pipeline_mode = #tpu.pipeline_mode<synchronous>, transform_indices = @transform_11, window_bounds = array<i64: 10, 128>}, {pipeline_mode = #tpu.pipeline_mode<synchronous>, transform_indices = @transform_12, window_bounds = array<i64: 1, 128>}, {transform_indices = @transform_13, window_bounds = array<i64: 8, 128>}]} {
    %c0 = arith.constant 0 : index
    %c0_0 = arith.constant 0 : index
    %0 = vector.load %arg1[%c0, %c0_0] : memref<8x150xf32, #tpu.memory_space<vmem>>, vector<8x150xf32>
    %c0_1 = arith.constant 0 : index
    %c0_2 = arith.constant 0 : index
    %1 = vector.load %arg2[%c0_1, %c0_2] : memref<150x130xf32, #tpu.memory_space<vmem>>, vector<150x130xf32>
    %cst = arith.constant dense<0.000000e+00> : vector<8x130xf32>
    %2 = tpu.matmul %0, %1, %cst {dimension_numbers = #tpu.dot_dimension_numbers<[1], [0], [0], [1], [0, 0, 1, 1], [], []>} : vector<8x150xf32>, vector<150x130xf32>, vector<8x130xf32> -> vector<8x130xf32>
    %c0_3 = arith.constant 0 : index
    %c0_4 = arith.constant 0 : index
    %3 = vector.load %arg4[%c0_3, %c0_4] : memref<1x130xf32, #tpu.memory_space<vmem>>, vector<1x130xf32>
    %4 = vector.broadcast %3 : vector<1x130xf32> to vector<8x130xf32>
    %5 = arith.addf %2, %4 : vector<8x130xf32>
    %cst_5 = arith.constant 0.000000e+00 : f32
    %6 = vector.broadcast %cst_5 : f32 to vector<8x130xf32>
    %7 = arith.maximumf %5, %6 : vector<8x130xf32>
    %c0_6 = arith.constant 0 : index
    %c0_7 = arith.constant 0 : index
    %8 = vector.load %arg3[%c0_6, %c0_7] : memref<150x130xf32, #tpu.memory_space<vmem>>, vector<150x130xf32>
    %cst_8 = arith.constant dense<0.000000e+00> : vector<8x130xf32>
    %9 = tpu.matmul %0, %8, %cst_8 {dimension_numbers = #tpu.dot_dimension_numbers<[1], [0], [0], [1], [0, 0, 1, 1], [], []>} : vector<8x150xf32>, vector<150x130xf32>, vector<8x130xf32> -> vector<8x130xf32>
    %c0_9 = arith.constant 0 : index
    %c0_10 = arith.constant 0 : index
    %10 = vector.load %arg4[%c0_9, %c0_10] : memref<1x130xf32, #tpu.memory_space<vmem>>, vector<1x130xf32>
    %11 = vector.broadcast %10 : vector<1x130xf32> to vector<8x130xf32>
    %12 = arith.addf %9, %11 : vector<8x130xf32>
    %cst_11 = arith.constant 0.000000e+00 : f32
    %13 = vector.broadcast %cst_11 : f32 to vector<8x130xf32>
    %14 = arith.maximumf %12, %13 : vector<8x130xf32>
    %15 = arith.maximumf %7, %14 : vector<8x130xf32>
    %c0_12 = arith.constant 0 : index
    %c0_13 = arith.constant 0 : index
    %16 = vector.load %arg5[%c0_12, %c0_13] : memref<130x60xf32, #tpu.memory_space<vmem>>, vector<130x60xf32>
    %cst_14 = arith.constant dense<0.000000e+00> : vector<8x60xf32>
    %17 = tpu.matmul %15, %16, %cst_14 {dimension_numbers = #tpu.dot_dimension_numbers<[1], [0], [0], [1], [0, 0, 1, 1], [], []>} : vector<8x130xf32>, vector<130x60xf32>, vector<8x60xf32> -> vector<8x60xf32>
    %c0_15 = arith.constant 0 : index
    %c0_16 = arith.constant 0 : index
    %18 = vector.load %arg7[%c0_15, %c0_16] : memref<1x60xf32, #tpu.memory_space<vmem>>, vector<1x60xf32>
    %19 = vector.broadcast %18 : vector<1x60xf32> to vector<8x60xf32>
    %20 = arith.addf %17, %19 : vector<8x60xf32>
    %cst_17 = arith.constant 0.000000e+00 : f32
    %21 = vector.broadcast %cst_17 : f32 to vector<8x60xf32>
    %22 = arith.maximumf %20, %21 : vector<8x60xf32>
    %c0_18 = arith.constant 0 : index
    %c0_19 = arith.constant 0 : index
    %23 = vector.load %arg6[%c0_18, %c0_19] : memref<130x60xf32, #tpu.memory_space<vmem>>, vector<130x60xf32>
    %cst_20 = arith.constant dense<0.000000e+00> : vector<8x60xf32>
    %24 = tpu.matmul %15, %23, %cst_20 {dimension_numbers = #tpu.dot_dimension_numbers<[1], [0], [0], [1], [0, 0, 1, 1], [], []>} : vector<8x130xf32>, vector<130x60xf32>, vector<8x60xf32> -> vector<8x60xf32>
    %c0_21 = arith.constant 0 : index
    %c0_22 = arith.constant 0 : index
    %25 = vector.load %arg7[%c0_21, %c0_22] : memref<1x60xf32, #tpu.memory_space<vmem>>, vector<1x60xf32>
    %26 = vector.broadcast %25 : vector<1x60xf32> to vector<8x60xf32>
    %27 = arith.addf %24, %26 : vector<8x60xf32>
    %cst_23 = arith.constant 0.000000e+00 : f32
    %28 = vector.broadcast %cst_23 : f32 to vector<8x60xf32>
    %29 = arith.maximumf %27, %28 : vector<8x60xf32>
    %30 = arith.maximumf %22, %29 : vector<8x60xf32>
    %c0_24 = arith.constant 0 : index
    %c0_25 = arith.constant 0 : index
    %31 = vector.load %arg8[%c0_24, %c0_25] : memref<60x30xf32, #tpu.memory_space<vmem>>, vector<60x30xf32>
    %cst_26 = arith.constant dense<0.000000e+00> : vector<8x30xf32>
    %32 = tpu.matmul %30, %31, %cst_26 {dimension_numbers = #tpu.dot_dimension_numbers<[1], [0], [0], [1], [0, 0, 1, 1], [], []>} : vector<8x60xf32>, vector<60x30xf32>, vector<8x30xf32> -> vector<8x30xf32>
    %c0_27 = arith.constant 0 : index
    %c0_28 = arith.constant 0 : index
    %33 = vector.load %arg9[%c0_27, %c0_28] : memref<1x30xf32, #tpu.memory_space<vmem>>, vector<1x30xf32>
    %34 = vector.broadcast %33 : vector<1x30xf32> to vector<8x30xf32>
    %35 = arith.addf %32, %34 : vector<8x30xf32>
    %cst_29 = arith.constant 0.000000e+00 : f32
    %36 = vector.broadcast %cst_29 : f32 to vector<8x30xf32>
    %37 = arith.maximumf %35, %36 : vector<8x30xf32>
    %c0_30 = arith.constant 0 : index
    %c0_31 = arith.constant 0 : index
    %38 = vector.load %arg10[%c0_30, %c0_31] : memref<30x10xf32, #tpu.memory_space<vmem>>, vector<30x10xf32>
    %cst_32 = arith.constant dense<0.000000e+00> : vector<8x10xf32>
    %39 = tpu.matmul %37, %38, %cst_32 {dimension_numbers = #tpu.dot_dimension_numbers<[1], [0], [0], [1], [0, 0, 1, 1], [], []>} : vector<8x30xf32>, vector<30x10xf32>, vector<8x10xf32> -> vector<8x10xf32>
    %c0_33 = arith.constant 0 : index
    %c0_34 = arith.constant 0 : index
    %40 = vector.load %arg11[%c0_33, %c0_34] : memref<1x10xf32, #tpu.memory_space<vmem>>, vector<1x10xf32>
    %41 = vector.broadcast %40 : vector<1x10xf32> to vector<8x10xf32>
    %42 = arith.addf %39, %41 : vector<8x10xf32>
    %cst_35 = arith.constant 0.000000e+00 : f32
    %43 = vector.broadcast %cst_35 : f32 to vector<8x10xf32>
    %44 = arith.maximumf %42, %43 : vector<8x10xf32>
    %c0_36 = arith.constant 0 : index
    %c0_37 = arith.constant 0 : index
    %45 = vector.load %arg12[%c0_36, %c0_37] : memref<10x128xf32, #tpu.memory_space<vmem>>, vector<10x128xf32>
    %cst_38 = arith.constant dense<0.000000e+00> : vector<8x128xf32>
    %46 = tpu.matmul %44, %45, %cst_38 {dimension_numbers = #tpu.dot_dimension_numbers<[1], [0], [0], [1], [0, 0, 1, 1], [], []>} : vector<8x10xf32>, vector<10x128xf32>, vector<8x128xf32> -> vector<8x128xf32>
    %c0_39 = arith.constant 0 : index
    %c0_40 = arith.constant 0 : index
    %47 = vector.load %arg13[%c0_39, %c0_40] : memref<1x128xf32, #tpu.memory_space<vmem>>, vector<1x128xf32>
    %48 = vector.broadcast %47 : vector<1x128xf32> to vector<8x128xf32>
    %49 = arith.addf %46, %48 : vector<8x128xf32>
    %c0_41 = arith.constant 0 : index
    %c0_42 = arith.constant 0 : index
    %50 = vector.load %arg14[%c0_41, %c0_42] : memref<8x128xf32, #tpu.memory_space<vmem>>, vector<8x128xf32>
    tpu.vector_store %arg14[%c0_41, %c0_42], %49 {strides = array<i32>} : memref<8x128xf32, #tpu.memory_space<vmem>>, vector<8x128xf32>,
    return
  }
  func.func @transform_0(%arg0: i32) -> (i32, i32) {
    %c0_i32 = arith.constant 0 : i32
    %c0_i32_0 = arith.constant 0 : i32
    return %arg0, %c0_i32 : i32, i32
  }
  func.func @transform_1(%arg0: i32) -> (i32, i32) {
    %c0_i32 = arith.constant 0 : i32
    %c0_i32_0 = arith.constant 0 : i32
    %c0_i32_1 = arith.constant 0 : i32
    return %c0_i32, %c0_i32_0 : i32, i32
  }
  func.func @transform_2(%arg0: i32) -> (i32, i32) {
    %c0_i32 = arith.constant 0 : i32
    %c0_i32_0 = arith.constant 0 : i32
    %c0_i32_1 = arith.constant 0 : i32
    return %c0_i32, %c0_i32_0 : i32, i32
  }
  func.func @transform_3(%arg0: i32) -> (i32, i32) {
    %c0_i32 = arith.constant 0 : i32
    %c0_i32_0 = arith.constant 0 : i32
    %c0_i32_1 = arith.constant 0 : i32
    return %c0_i32, %c0_i32_0 : i32, i32
  }
  func.func @transform_4(%arg0: i32) -> (i32, i32) {
    %c0_i32 = arith.constant 0 : i32
    %c0_i32_0 = arith.constant 0 : i32
    %c0_i32_1 = arith.constant 0 : i32
    return %c0_i32, %c0_i32_0 : i32, i32
  }
  func.func @transform_5(%arg0: i32) -> (i32, i32) {
    %c0_i32 = arith.constant 0 : i32
    %c0_i32_0 = arith.constant 0 : i32
    %c0_i32_1 = arith.constant 0 : i32
    return %c0_i32, %c0_i32_0 : i32, i32
  }
  func.func @transform_6(%arg0: i32) -> (i32, i32) {
    %c0_i32 = arith.constant 0 : i32
    %c0_i32_0 = arith.constant 0 : i32
    %c0_i32_1 = arith.constant 0 : i32
    return %c0_i32, %c0_i32_0 : i32, i32
  }
  func.func @transform_7(%arg0: i32) -> (i32, i32) {
    %c0_i32 = arith.constant 0 : i32
    %c0_i32_0 = arith.constant 0 : i32
    %c0_i32_1 = arith.constant 0 : i32
    return %c0_i32, %c0_i32_0 : i32, i32
  }
  func.func @transform_8(%arg0: i32) -> (i32, i32) {
    %c0_i32 = arith.constant 0 : i32
    %c0_i32_0 = arith.constant 0 : i32
    %c0_i32_1 = arith.constant 0 : i32
    return %c0_i32, %c0_i32_0 : i32, i32
  }
  func.func @transform_9(%arg0: i32) -> (i32, i32) {
    %c0_i32 = arith.constant 0 : i32
    %c0_i32_0 = arith.constant 0 : i32
    %c0_i32_1 = arith.constant 0 : i32
    return %c0_i32, %c0_i32_0 : i32, i32
  }
  func.func @transform_10(%arg0: i32) -> (i32, i32) {
    %c0_i32 = arith.constant 0 : i32
    %c0_i32_0 = arith.constant 0 : i32
    %c0_i32_1 = arith.constant 0 : i32
    return %c0_i32, %c0_i32_0 : i32, i32
  }
  func.func @transform_11(%arg0: i32) -> (i32, i32) {
    %c0_i32 = arith.constant 0 : i32
    %c0_i32_0 = arith.constant 0 : i32
    %c0_i32_1 = arith.constant 0 : i32
    return %c0_i32, %c0_i32_0 : i32, i32
  }
  func.func @transform_12(%arg0: i32) -> (i32, i32) {
    %c0_i32 = arith.constant 0 : i32
    %c0_i32_0 = arith.constant 0 : i32
    %c0_i32_1 = arith.constant 0 : i32
    return %c0_i32, %c0_i32_0 : i32, i32
  }
  func.func @transform_13(%arg0: i32) -> (i32, i32) {
    %c0_i32 = arith.constant 0 : i32
    %c0_i32_0 = arith.constant 0 : i32
    return %arg0, %c0_i32 : i32, i32
  }
}

</mosaic_0001>

<llo_original>
// kernel: tpu_custom_call.1
$region0: #{tpu_custom_call.1}
  #allocation0 [shape = 'u32[]', space=smem, size = 0x4, offset = 0x4, fixed_abs, tag = 'smem constant byte address 0x4 - core index']
  #allocation1 [shape = 'u32[144,128]{1,0:T(1,128)}', space=vmem, size = 0x12000, scoped, tag = 'internal scratch']
  %s0 = inlined_call_operand.vmem [shape: f32[8,150], index: 0, kind: input, shape index: {}]
  %s1 = inlined_call_operand.vmem [shape: f32[150,130], index: 1, kind: input, shape index: {}]
  %s2 = inlined_call_operand.vmem [shape: f32[150,130], index: 2, kind: input, shape index: {}]
  %s3 = inlined_call_operand.vmem [shape: f32[1,130], index: 3, kind: input, shape index: {}]
  %s4 = inlined_call_operand.vmem [shape: f32[130,60], index: 4, kind: input, shape index: {}]
  %s5 = inlined_call_operand.vmem [shape: f32[130,60], index: 5, kind: input, shape index: {}]
  %s6 = inlined_call_operand.vmem [shape: f32[1,60], index: 6, kind: input, shape index: {}]
  %s7 = inlined_call_operand.vmem [shape: f32[60,30], index: 7, kind: input, shape index: {}]
  %s8 = inlined_call_operand.vmem [shape: f32[1,30], index: 8, kind: input, shape index: {}]
  %s9 = inlined_call_operand.vmem [shape: f32[30,10], index: 9, kind: input, shape index: {}]
  %s10 = inlined_call_operand.vmem [shape: f32[1,10], index: 10, kind: input, shape index: {}]
  %s11 = inlined_call_operand.vmem [shape: f32[10,128], index: 11, kind: input, shape index: {}]
  %s12 = inlined_call_operand.vmem [shape: f32[1,128], index: 12, kind: input, shape index: {}]
  %s13 = inlined_call_operand.hbm [shape: f32[8,128], index: 13, kind: output, shape index: {}]
  %s14 = sld [smem:[#allocation0]]
  $region62: #{tpu_custom_call.1} parent=0
    _
  %s16 = ssub.s32 1, %s14
  %s17 = scalar_select 0, %s16, %s14
  $region1: #{tpu_custom_call.1} parent=0
    #allocation2 [shape = 'u8[4096]{0}', space=vmem, size = 0x1000, scoped, tag = 'output window, operand 0, single buffered']
    #allocation3 [shape = 's32[1]{0}', space=sflag, size = 0x4, scoped, tag = 'scoped memory for tpu_custom_call.1']
    %18 = vsyncpa [#allocation3], 0
    // Predicated region
    $region2: #{tpu_custom_call.1} parent=1 // pred_check
      _
    $region3: #{tpu_custom_call.1} parent=1 // pred_check_branch
      %20 = sbr.rel (0) target = $region5
    $region4: #{tpu_custom_call.1} parent=1 // pred_region
      _
    $region5: #{tpu_custom_call.1} parent=1 // pred_fallthru
      _
    // Predicated region
    $region6: #{tpu_custom_call.1} parent=1 // pred_check
      _
    $region7: #{tpu_custom_call.1} parent=1 // pred_check_branch
      %22 = sbr.rel (0) target = $region9
    $region8: #{tpu_custom_call.1} parent=1 // pred_region
      _
    $region9: #{tpu_custom_call.1} parent=1 // pred_fallthru
      _
    // Predicated region
    $region10: #{tpu_custom_call.1} parent=1 // pred_check
      _
    $region11: #{tpu_custom_call.1} parent=1 // pred_check_branch
      %24 = sbr.rel (0) target = $region13
    $region12: #{tpu_custom_call.1} parent=1 // pred_region
      _
    $region13: #{tpu_custom_call.1} parent=1 // pred_fallthru
      _
    // Predicated region
    $region14: #{tpu_custom_call.1} parent=1 // pred_check
      _
    $region15: #{tpu_custom_call.1} parent=1 // pred_check_branch
      %26 = sbr.rel (0) target = $region17
    $region16: #{tpu_custom_call.1} parent=1 // pred_region
      _
    $region17: #{tpu_custom_call.1} parent=1 // pred_fallthru
      _
    // Predicated region
    $region18: #{tpu_custom_call.1} parent=1 // pred_check
      _
    $region19: #{tpu_custom_call.1} parent=1 // pred_check_branch
      %28 = sbr.rel (0) target = $region21
    $region20: #{tpu_custom_call.1} parent=1 // pred_region
      _
    $region21: #{tpu_custom_call.1} parent=1 // pred_fallthru
      _
    // Predicated region
    $region22: #{tpu_custom_call.1} parent=1 // pred_check
      _
    $region23: #{tpu_custom_call.1} parent=1 // pred_check_branch
      %30 = sbr.rel (0) target = $region25
    $region24: #{tpu_custom_call.1} parent=1 // pred_region
      _
    $region25: #{tpu_custom_call.1} parent=1 // pred_fallthru
      _
    // Predicated region
    $region26: #{tpu_custom_call.1} parent=1 // pred_check
      _
    $region27: #{tpu_custom_call.1} parent=1 // pred_check_branch
      %32 = sbr.rel (0) target = $region29
    $region28: #{tpu_custom_call.1} parent=1 // pred_region
      _
    $region29: #{tpu_custom_call.1} parent=1 // pred_fallthru
      _
    // Predicated region
    $region30: #{tpu_custom_call.1} parent=1 // pred_check
      _
    $region31: #{tpu_custom_call.1} parent=1 // pred_check_branch
      %34 = sbr.rel (0) target = $region33
    $region32: #{tpu_custom_call.1} parent=1 // pred_region
      _
    $region33: #{tpu_custom_call.1} parent=1 // pred_fallthru
      _
    // Predicated region
    $region34: #{tpu_custom_call.1} parent=1 // pred_check
      _
    $region35: #{tpu_custom_call.1} parent=1 // pred_check_branch
      %36 = sbr.rel (0) target = $region37
    $region36: #{tpu_custom_call.1} parent=1 // pred_region
      _
    $region37: #{tpu_custom_call.1} parent=1 // pred_fallthru
      _
    // Predicated region
    $region38: #{tpu_custom_call.1} parent=1 // pred_check
      _
    $region39: #{tpu_custom_call.1} parent=1 // pred_check_branch
      %38 = sbr.rel (0) target = $region41
    $region40: #{tpu_custom_call.1} parent=1 // pred_region
      _
    $region41: #{tpu_custom_call.1} parent=1 // pred_fallthru
      _
    // Predicated region
    $region42: #{tpu_custom_call.1} parent=1 // pred_check
      _
    $region43: #{tpu_custom_call.1} parent=1 // pred_check_branch
      %40 = sbr.rel (0) target = $region45
    $region44: #{tpu_custom_call.1} parent=1 // pred_region
      _
    $region45: #{tpu_custom_call.1} parent=1 // pred_fallthru
      _
    // Predicated region
    $region46: #{tpu_custom_call.1} parent=1 // pred_check
      _
    $region47: #{tpu_custom_call.1} parent=1 // pred_check_branch
      %42 = sbr.rel (0) target = $region49
    $region48: #{tpu_custom_call.1} parent=1 // pred_region
      _
    $region49: #{tpu_custom_call.1} parent=1 // pred_fallthru
      _
    // Predicated region
    $region50: #{tpu_custom_call.1} parent=1 // pred_check
      _
    $region51: #{tpu_custom_call.1} parent=1 // pred_check_branch
      %44 = sbr.rel (0) target = $region53
    $region52: #{tpu_custom_call.1} parent=1 // pred_region
      _
    $region53: #{tpu_custom_call.1} parent=1 // pred_fallthru
      _
    %v45 = vld [vmem:[%s0] sm:$0xff]
    %v46 = vld [vmem:[%s0 + $0x8] sm:$0xff]
    %v47 = vld [vmem:[%s1] sm:$0xff]
    %v48 = vld [vmem:[%s1 + $0x8] sm:$0xff]
    %v49 = vld [vmem:[%s1 + $0x10] sm:$0xff]
    %v50 = vld [vmem:[%s1 + $0x18] sm:$0xff]
    %v51 = vld [vmem:[%s1 + $0x20] sm:$0xff]
    %v52 = vld [vmem:[%s1 + $0x28] sm:$0xff]
    %v53 = vld [vmem:[%s1 + $0x30] sm:$0xff]
    %v54 = vld [vmem:[%s1 + $0x38] sm:$0xff]
    %v55 = vld [vmem:[%s1 + $0x40] sm:$0xff]
    %v56 = vld [vmem:[%s1 + $0x48] sm:$0xff]
    %v57 = vld [vmem:[%s1 + $0x50] sm:$0xff]
    %v58 = vld [vmem:[%s1 + $0x58] sm:$0xff]
    %v59 = vld [vmem:[%s1 + $0x60] sm:$0xff]
    %v60 = vld [vmem:[%s1 + $0x68] sm:$0xff]
    %v61 = vld [vmem:[%s1 + $0x70] sm:$0xff]
    %v62 = vld [vmem:[%s1 + $0x78] sm:$0xff]
    %v63 = vld [vmem:[%s1 + $0x80] sm:$0xff]
    %v64 = vld [vmem:[%s1 + $0x88] sm:$0xff]
    %v65 = vld [vmem:[%s1 + $0x90] sm:$0xff]
    %v66 = vld [vmem:[%s1 + $0x98] sm:$0xff]
    %v67 = vld [vmem:[%s1 + $0xa0] sm:$0xff]
    %v68 = vld [vmem:[%s1 + $0xa8] sm:$0xff]
    %v69 = vld [vmem:[%s1 + $0xb0] sm:$0xff]
    %v70 = vld [vmem:[%s1 + $0xb8] sm:$0xff]
    %v71 = vld [vmem:[%s1 + $0xc0] sm:$0xff]
    %v72 = vld [vmem:[%s1 + $0xc8] sm:$0xff]
    %v73 = vld [vmem:[%s1 + $0xd0] sm:$0xff]
    %v74 = vld [vmem:[%s1 + $0xd8] sm:$0xff]
    %v75 = vld [vmem:[%s1 + $0xe0] sm:$0xff]
    %v76 = vld [vmem:[%s1 + $0xe8] sm:$0xff]
    %v77 = vld [vmem:[%s1 + $0xf0] sm:$0xff]
    %v78 = vld [vmem:[%s1 + $0xf8] sm:$0xff]
    %v79 = vld [vmem:[%s1 + $0x100] sm:$0xff]
    %v80 = vld [vmem:[%s1 + $0x108] sm:$0xff]
    %v81 = vld [vmem:[%s1 + $0x110] sm:$0xff]
    %v82 = vld [vmem:[%s1 + $0x118] sm:$0xff]
    %v83 = vld [vmem:[%s1 + $0x120] sm:$0x3f]
    %v84 = vld [vmem:[%s1 + $0x128] sm:$0x3f]
    %v85 = vld [vmem:[%s3] sm:$0x3]
    %v87 = vlaneseq
    %v88 = vshrl.u32 %v87, 7
    %v89 = vsub.s32 0, %v88
    %v90 = vrot.slane %v85, %v89
    %v91 = vlaneseq
    %v92 = vshrl.u32 %v91, 7
    %v93 = vsub.s32 1, %v92
    %v94 = vrot.slane %v85, %v93
    %vm97 = vcmask 179200
    %v99 = vsel %vm97, %v46, 0
    %vm101 = vcmask 1045504
    %v103 = vsel %vm101, %v83, 0
    %v106 = vsel %vm101, %v84, 0
    %108 = vmatprep.subr.mxu0 %v48
    %109 = vmatpush1.msra.mxu0 %v47
    %110 = vmatprep.subr.mxu0 %v50
    %111 = vmatpush1.msra.mxu0 %v49
    %112 = vmatprep.subr.mxu0 %v52
    %113 = vmatpush1.msra.mxu0 %v51
    %114 = vmatprep.subr.mxu0 %v54
    %115 = vmatpush1.msra.mxu0 %v53
    %116 = vmatprep.subr.mxu0 %v56
    %117 = vmatpush1.msra.mxu0 %v55
    %118 = vmatprep.subr.mxu0 %v58
    %119 = vmatpush1.msra.mxu0 %v57
    %120 = vmatprep.subr.mxu0 %v60
    %121 = vmatpush1.msra.mxu0 %v59
    %122 = vmatprep.subr.mxu0 %v62
    %123 = vmatpush1.msra.mxu0 %v61
    %124 = vmatprep.subr.mxu0 %v64
    %125 = vmatpush1.msra.mxu0 %v63
    %126 = vmatprep.subr.mxu0 %v66
    %127 = vmatpush1.msra.mxu0 %v65
    %128 = vmatprep.subr.mxu0 %v68
    %129 = vmatpush1.msra.mxu0 %v67
    %130 = vmatprep.subr.mxu0 %v70
    %131 = vmatpush1.msra.mxu0 %v69
    %132 = vmatprep.subr.mxu0 %v72
    %133 = vmatpush1.msra.mxu0 %v71
    %134 = vmatprep.subr.mxu0 %v74
    %135 = vmatpush1.msra.mxu0 %v73
    %136 = vmatprep.subr.mxu0 %v76
    %137 = vmatpush1.msra.mxu0 %v75
    %138 = vmatprep.subr.mxu0 %v78
    %139 = vmatpush1.msra.mxu0 %v77
    %140 = vmatprep.subr.mxu0 %v80
    %141 = vmatpush1.msra.mxu0 %v79
    %142 = vmatprep.subr.mxu0 %v82
    %143 = vmatpush1.msra.mxu0 %v81
    %144 = vmatprep.subr.mxu0 %v106
    %145 = vmatpush1.msra.mxu0 %v103
    %146 = vmatprep.subr.mxu0 0.0
    %147 = vmatpush1.msra.mxu0 0.0
    %148 = vmatprep.subr.mxu0 0.0
    %149 = vmatpush1.msra.mxu0 0.0
    %150 = vmatprep.subr.mxu0 0.0
    %151 = vmatpush1.msra.mxu0 0.0
    %152 = vmatprep.subr.mxu0 0.0
    %153 = vmatpush1.msra.mxu0 0.0
    %154 = vmatprep.subr.mxu0 0.0
    %155 = vmatpush1.msra.mxu0 0.0
    %156 = vmatprep.subr.mxu0 0.0
    %157 = vmatpush1.msra.mxu0 0.0
    %158 = vmatprep.subr.mxu0 0.0
    %159 = vmatpush1.msra.mxu0 0.0
    %160 = vmatprep.subr.mxu0 0.0
    %161 = vmatpush1.msra.mxu0 0.0
    %162 = vmatprep.subr.mxu0 0.0
    %163 = vmatpush1.msra.mxu0 0.0
    %164 = vmatprep.subr.mxu0 0.0
    %165 = vmatpush1.msra.mxu0 0.0
    %166 = vmatprep.subr.mxu0 0.0
    %167 = vmatpush1.msra.mxu0 0.0
    %168 = vmatprep.subr.mxu0 0.0
    %169 = vmatpush1.msra.mxu0 0.0
    %170 = vmatprep.subr.mxu0 0.0
    %171 = vmatpush1.msra.mxu0 0.0
    %172 = vmatprep.mubr.f32.mxu0 %v99
    %173 = vmatmul.mubr.f32.gmra.mrb[0].mxu0 %v45
    %v174 = vpop.f32.mrb[0].mxu0
    %v175 = vadd.f32 %v90, %v174
    %v176 = vpop.f32.mrb[0].mxu0
    %v177 = vadd.f32 %v94, %v176
    %178 = vdwg.mxu0
    %v179 = vmax.f32 %v175, 0.0
    %v180 = vmax.f32 %v177, 0.0
    %v181 = vld [vmem:[%s2] sm:$0xff]
    %v182 = vld [vmem:[%s2 + $0x8] sm:$0xff]
    %v183 = vld [vmem:[%s2 + $0x10] sm:$0xff]
    %v184 = vld [vmem:[%s2 + $0x18] sm:$0xff]
    %v185 = vld [vmem:[%s2 + $0x20] sm:$0xff]
    %v186 = vld [vmem:[%s2 + $0x28] sm:$0xff]
    %v187 = vld [vmem:[%s2 + $0x30] sm:$0xff]
    %v188 = vld [vmem:[%s2 + $0x38] sm:$0xff]
    %v189 = vld [vmem:[%s2 + $0x40] sm:$0xff]
    %v190 = vld [vmem:[%s2 + $0x48] sm:$0xff]
    %v191 = vld [vmem:[%s2 + $0x50] sm:$0xff]
    %v192 = vld [vmem:[%s2 + $0x58] sm:$0xff]
    %v193 = vld [vmem:[%s2 + $0x60] sm:$0xff]
    %v194 = vld [vmem:[%s2 + $0x68] sm:$0xff]
    %v195 = vld [vmem:[%s2 + $0x70] sm:$0xff]
    %v196 = vld [vmem:[%s2 + $0x78] sm:$0xff]
    %v197 = vld [vmem:[%s2 + $0x80] sm:$0xff]
    %v198 = vld [vmem:[%s2 + $0x88] sm:$0xff]
    %v199 = vld [vmem:[%s2 + $0x90] sm:$0xff]
    %v200 = vld [vmem:[%s2 + $0x98] sm:$0xff]
    %v201 = vld [vmem:[%s2 + $0xa0] sm:$0xff]
    %v202 = vld [vmem:[%s2 + $0xa8] sm:$0xff]
    %v203 = vld [vmem:[%s2 + $0xb0] sm:$0xff]
    %v204 = vld [vmem:[%s2 + $0xb8] sm:$0xff]
    %v205 = vld [vmem:[%s2 + $0xc0] sm:$0xff]
    %v206 = vld [vmem:[%s2 + $0xc8] sm:$0xff]
    %v207 = vld [vmem:[%s2 + $0xd0] sm:$0xff]
    %v208 = vld [vmem:[%s2 + $0xd8] sm:$0xff]
    %v209 = vld [vmem:[%s2 + $0xe0] sm:$0xff]
    %v210 = vld [vmem:[%s2 + $0xe8] sm:$0xff]
    %v211 = vld [vmem:[%s2 + $0xf0] sm:$0xff]
    %v212 = vld [vmem:[%s2 + $0xf8] sm:$0xff]
    %v213 = vld [vmem:[%s2 + $0x100] sm:$0xff]
    %v214 = vld [vmem:[%s2 + $0x108] sm:$0xff]
    %v215 = vld [vmem:[%s2 + $0x110] sm:$0xff]
    %v216 = vld [vmem:[%s2 + $0x118] sm:$0xff]
    %v217 = vld [vmem:[%s2 + $0x120] sm:$0x3f]
    %v218 = vld [vmem:[%s2 + $0x128] sm:$0x3f]
    %v220 = vsel %vm101, %v217, 0
    %v223 = vsel %vm101, %v218, 0
    %225 = vmatprep.subr.mxu0 %v182
    %226 = vmatpush1.msra.mxu0 %v181
    %227 = vmatprep.subr.mxu0 %v184
    %228 = vmatpush1.msra.mxu0 %v183
    %229 = vmatprep.subr.mxu0 %v186
    %230 = vmatpush1.msra.mxu0 %v185
    %231 = vmatprep.subr.mxu0 %v188
    %232 = vmatpush1.msra.mxu0 %v187
    %233 = vmatprep.subr.mxu0 %v190
    %234 = vmatpush1.msra.mxu0 %v189
    %235 = vmatprep.subr.mxu0 %v192
    %236 = vmatpush1.msra.mxu0 %v191
    %237 = vmatprep.subr.mxu0 %v194
    %238 = vmatpush1.msra.mxu0 %v193
    %239 = vmatprep.subr.mxu0 %v196
    %240 = vmatpush1.msra.mxu0 %v195
    %241 = vmatprep.subr.mxu0 %v198
    %242 = vmatpush1.msra.mxu0 %v197
    %243 = vmatprep.subr.mxu0 %v200
    %244 = vmatpush1.msra.mxu0 %v199
    %245 = vmatprep.subr.mxu0 %v202
    %246 = vmatpush1.msra.mxu0 %v201
    %247 = vmatprep.subr.mxu0 %v204
    %248 = vmatpush1.msra.mxu0 %v203
    %249 = vmatprep.subr.mxu0 %v206
    %250 = vmatpush1.msra.mxu0 %v205
    %251 = vmatprep.subr.mxu0 %v208
    %252 = vmatpush1.msra.mxu0 %v207
    %253 = vmatprep.subr.mxu0 %v210
    %254 = vmatpush1.msra.mxu0 %v209
    %255 = vmatprep.subr.mxu0 %v212
    %256 = vmatpush1.msra.mxu0 %v211
    %257 = vmatprep.subr.mxu0 %v214
    %258 = vmatpush1.msra.mxu0 %v213
    %259 = vmatprep.subr.mxu0 %v216
    %260 = vmatpush1.msra.mxu0 %v215
    %261 = vmatprep.subr.mxu0 %v223
    %262 = vmatpush1.msra.mxu0 %v220
    %263 = vmatprep.subr.mxu0 0.0
    %264 = vmatpush1.msra.mxu0 0.0
    %265 = vmatprep.subr.mxu0 0.0
    %266 = vmatpush1.msra.mxu0 0.0
    %267 = vmatprep.subr.mxu0 0.0
    %268 = vmatpush1.msra.mxu0 0.0
    %269 = vmatprep.subr.mxu0 0.0
    %270 = vmatpush1.msra.mxu0 0.0
    %271 = vmatprep.subr.mxu0 0.0
    %272 = vmatpush1.msra.mxu0 0.0
    %273 = vmatprep.subr.mxu0 0.0
    %274 = vmatpush1.msra.mxu0 0.0
    %275 = vmatprep.subr.mxu0 0.0
    %276 = vmatpush1.msra.mxu0 0.0
    %277 = vmatprep.subr.mxu0 0.0
    %278 = vmatpush1.msra.mxu0 0.0
    %279 = vmatprep.subr.mxu0 0.0
    %280 = vmatpush1.msra.mxu0 0.0
    %281 = vmatprep.subr.mxu0 0.0
    %282 = vmatpush1.msra.mxu0 0.0
    %283 = vmatprep.subr.mxu0 0.0
    %284 = vmatpush1.msra.mxu0 0.0
    %285 = vmatprep.subr.mxu0 0.0
    %286 = vmatpush1.msra.mxu0 0.0
    %287 = vmatprep.subr.mxu0 0.0
    %288 = vmatpush1.msra.mxu0 0.0
    %289 = vmatprep.mubr.f32.mxu0 %v99
    %290 = vmatmul.mubr.f32.gmra.mrb[0].mxu0 %v45
    %v291 = vpop.f32.mrb[0].mxu0
    %v292 = vadd.f32 %v90, %v291
    %v293 = vpop.f32.mrb[0].mxu0
    %v294 = vadd.f32 %v94, %v293
    %295 = vdwg.mxu0
    %v296 = vmax.f32 %v292, 0.0
    %v297 = vmax.f32 %v294, 0.0
    %v298 = vmax.f32 %v179, %v296
    %v299 = vmax.f32 %v180, %v297
    %v300 = vld [vmem:[%s4] sm:$0xff]
    %v301 = vld [vmem:[%s4 + $0x8] sm:$0xff]
    %v302 = vld [vmem:[%s4 + $0x10] sm:$0xff]
    %v303 = vld [vmem:[%s4 + $0x18] sm:$0xff]
    %v304 = vld [vmem:[%s4 + $0x20] sm:$0xff]
    %v305 = vld [vmem:[%s4 + $0x28] sm:$0xff]
    %v306 = vld [vmem:[%s4 + $0x30] sm:$0xff]
    %v307 = vld [vmem:[%s4 + $0x38] sm:$0xff]
    %v308 = vld [vmem:[%s4 + $0x40] sm:$0xff]
    %v309 = vld [vmem:[%s4 + $0x48] sm:$0xff]
    %v310 = vld [vmem:[%s4 + $0x50] sm:$0xff]
    %v311 = vld [vmem:[%s4 + $0x58] sm:$0xff]
    %v312 = vld [vmem:[%s4 + $0x60] sm:$0xff]
    %v313 = vld [vmem:[%s4 + $0x68] sm:$0xff]
    %v314 = vld [vmem:[%s4 + $0x70] sm:$0xff]
    %v315 = vld [vmem:[%s4 + $0x78] sm:$0xff]
    %v316 = vld [vmem:[%s4 + $0x80] sm:$0x3]
    %v317 = vld [vmem:[%s6] sm:$0x1]
    %v319 = vlaneseq
    %v320 = vshrl.u32 %v319, 7
    %v321 = vsub.s32 0, %v320
    %v322 = vrot.slane %v317, %v321
    %vm324 = vcmask 15360
    %v326 = vsel %vm324, %v299, 0
    %vm328 = vcmask 1041408
    %v330 = vsel %vm328, %v316, 0
    %332 = vmatprep.subr.mxu0 0.0
    %333 = vmatpush1.msra.mxu0 %v300
    %334 = vmatprep.subr.mxu0 0.0
    %335 = vmatpush1.msra.mxu0 %v301
    %336 = vmatprep.subr.mxu0 0.0
    %337 = vmatpush1.msra.mxu0 %v302
    %338 = vmatprep.subr.mxu0 0.0
    %339 = vmatpush1.msra.mxu0 %v303
    %340 = vmatprep.subr.mxu0 0.0
    %341 = vmatpush1.msra.mxu0 %v304
    %342 = vmatprep.subr.mxu0 0.0
    %343 = vmatpush1.msra.mxu0 %v305
    %344 = vmatprep.subr.mxu0 0.0
    %345 = vmatpush1.msra.mxu0 %v306
    %346 = vmatprep.subr.mxu0 0.0
    %347 = vmatpush1.msra.mxu0 %v307
    %348 = vmatprep.subr.mxu0 0.0
    %349 = vmatpush1.msra.mxu0 %v308
    %350 = vmatprep.subr.mxu0 0.0
    %351 = vmatpush1.msra.mxu0 %v309
    %352 = vmatprep.subr.mxu0 0.0
    %353 = vmatpush1.msra.mxu0 %v310
    %354 = vmatprep.subr.mxu0 0.0
    %355 = vmatpush1.msra.mxu0 %v311
    %356 = vmatprep.subr.mxu0 0.0
    %357 = vmatpush1.msra.mxu0 %v312
    %358 = vmatprep.subr.mxu0 0.0
    %359 = vmatpush1.msra.mxu0 %v313
    %360 = vmatprep.subr.mxu0 0.0
    %361 = vmatpush1.msra.mxu0 %v314
    %362 = vmatprep.subr.mxu0 0.0
    %363 = vmatpush1.msra.mxu0 %v315
    %364 = vmatprep.subr.mxu0 0.0
    %365 = vmatpush1.msra.mxu0 %v330
    %366 = vmatprep.subr.mxu0 0.0
    %367 = vmatpush1.msra.mxu0 0.0
    %368 = vmatprep.subr.mxu0 0.0
    %369 = vmatpush1.msra.mxu0 0.0
    %370 = vmatprep.subr.mxu0 0.0
    %371 = vmatpush1.msra.mxu0 0.0
    %372 = vmatprep.subr.mxu0 0.0
    %373 = vmatpush1.msra.mxu0 0.0
    %374 = vmatprep.subr.mxu0 0.0
    %375 = vmatpush1.msra.mxu0 0.0
    %376 = vmatprep.subr.mxu0 0.0
    %377 = vmatpush1.msra.mxu0 0.0
    %378 = vmatprep.subr.mxu0 0.0
    %379 = vmatpush1.msra.mxu0 0.0
    %380 = vmatprep.subr.mxu0 0.0
    %381 = vmatpush1.msra.mxu0 0.0
    %382 = vmatprep.subr.mxu0 0.0
    %383 = vmatpush1.msra.mxu0 0.0
    %384 = vmatprep.subr.mxu0 0.0
    %385 = vmatpush1.msra.mxu0 0.0
    %386 = vmatprep.subr.mxu0 0.0
    %387 = vmatpush1.msra.mxu0 0.0
    %388 = vmatprep.subr.mxu0 0.0
    %389 = vmatpush1.msra.mxu0 0.0
    %390 = vmatprep.subr.mxu0 0.0
    %391 = vmatpush1.msra.mxu0 0.0
    %392 = vmatprep.subr.mxu0 0.0
    %393 = vmatpush1.msra.mxu0 0.0
    %394 = vmatprep.subr.mxu0 0.0
    %395 = vmatpush1.msra.mxu0 0.0
    %396 = vmatprep.mubr.f32.mxu0 %v326
    %397 = vmatmul.mubr.f32.gmra.mrb[0].mxu0 %v298
    %v398 = vpop.f32.mrb[0].mxu0
    %v399 = vadd.f32 %v322, %v398
    %v400 = vpop.f32.mrb[0].mxu0
    %401 = vdwg.mxu0
    %v402 = vmax.f32 %v399, 0.0
    %v403 = vld [vmem:[%s5] sm:$0xff]
    %v404 = vld [vmem:[%s5 + $0x8] sm:$0xff]
    %v405 = vld [vmem:[%s5 + $0x10] sm:$0xff]
    %v406 = vld [vmem:[%s5 + $0x18] sm:$0xff]
    %v407 = vld [vmem:[%s5 + $0x20] sm:$0xff]
    %v408 = vld [vmem:[%s5 + $0x28] sm:$0xff]
    %v409 = vld [vmem:[%s5 + $0x30] sm:$0xff]
    %v410 = vld [vmem:[%s5 + $0x38] sm:$0xff]
    %v411 = vld [vmem:[%s5 + $0x40] sm:$0xff]
    %v412 = vld [vmem:[%s5 + $0x48] sm:$0xff]
    %v413 = vld [vmem:[%s5 + $0x50] sm:$0xff]
    %v414 = vld [vmem:[%s5 + $0x58] sm:$0xff]
    %v415 = vld [vmem:[%s5 + $0x60] sm:$0xff]
    %v416 = vld [vmem:[%s5 + $0x68] sm:$0xff]
    %v417 = vld [vmem:[%s5 + $0x70] sm:$0xff]
    %v418 = vld [vmem:[%s5 + $0x78] sm:$0xff]
    %v419 = vld [vmem:[%s5 + $0x80] sm:$0x3]
    %v421 = vsel %vm328, %v419, 0
    %423 = vmatprep.subr.mxu0 0.0
    %424 = vmatpush1.msra.mxu0 %v403
    %425 = vmatprep.subr.mxu0 0.0
    %426 = vmatpush1.msra.mxu0 %v404
    %427 = vmatprep.subr.mxu0 0.0
    %428 = vmatpush1.msra.mxu0 %v405
    %429 = vmatprep.subr.mxu0 0.0
    %430 = vmatpush1.msra.mxu0 %v406
    %431 = vmatprep.subr.mxu0 0.0
    %432 = vmatpush1.msra.mxu0 %v407
    %433 = vmatprep.subr.mxu0 0.0
    %434 = vmatpush1.msra.mxu0 %v408
    %435 = vmatprep.subr.mxu0 0.0
    %436 = vmatpush1.msra.mxu0 %v409
    %437 = vmatprep.subr.mxu0 0.0
    %438 = vmatpush1.msra.mxu0 %v410
    %439 = vmatprep.subr.mxu0 0.0
    %440 = vmatpush1.msra.mxu0 %v411
    %441 = vmatprep.subr.mxu0 0.0
    %442 = vmatpush1.msra.mxu0 %v412
    %443 = vmatprep.subr.mxu0 0.0
    %444 = vmatpush1.msra.mxu0 %v413
    %445 = vmatprep.subr.mxu0 0.0
    %446 = vmatpush1.msra.mxu0 %v414
    %447 = vmatprep.subr.mxu0 0.0
    %448 = vmatpush1.msra.mxu0 %v415
    %449 = vmatprep.subr.mxu0 0.0
    %450 = vmatpush1.msra.mxu0 %v416
    %451 = vmatprep.subr.mxu0 0.0
    %452 = vmatpush1.msra.mxu0 %v417
    %453 = vmatprep.subr.mxu0 0.0
    %454 = vmatpush1.msra.mxu0 %v418
    %455 = vmatprep.subr.mxu0 0.0
    %456 = vmatpush1.msra.mxu0 %v421
    %457 = vmatprep.subr.mxu0 0.0
    %458 = vmatpush1.msra.mxu0 0.0
    %459 = vmatprep.subr.mxu0 0.0
    %460 = vmatpush1.msra.mxu0 0.0
    %461 = vmatprep.subr.mxu0 0.0
    %462 = vmatpush1.msra.mxu0 0.0
    %463 = vmatprep.subr.mxu0 0.0
    %464 = vmatpush1.msra.mxu0 0.0
    %465 = vmatprep.subr.mxu0 0.0
    %466 = vmatpush1.msra.mxu0 0.0
    %467 = vmatprep.subr.mxu0 0.0
    %468 = vmatpush1.msra.mxu0 0.0
    %469 = vmatprep.subr.mxu0 0.0
    %470 = vmatpush1.msra.mxu0 0.0
    %471 = vmatprep.subr.mxu0 0.0
    %472 = vmatpush1.msra.mxu0 0.0
    %473 = vmatprep.subr.mxu0 0.0
    %474 = vmatpush1.msra.mxu0 0.0
    %475 = vmatprep.subr.mxu0 0.0
    %476 = vmatpush1.msra.mxu0 0.0
    %477 = vmatprep.subr.mxu0 0.0
    %478 = vmatpush1.msra.mxu0 0.0
    %479 = vmatprep.subr.mxu0 0.0
    %480 = vmatpush1.msra.mxu0 0.0
    %481 = vmatprep.subr.mxu0 0.0
    %482 = vmatpush1.msra.mxu0 0.0
    %483 = vmatprep.subr.mxu0 0.0
    %484 = vmatpush1.msra.mxu0 0.0
    %485 = vmatprep.subr.mxu0 0.0
    %486 = vmatpush1.msra.mxu0 0.0
    %487 = vmatprep.mubr.f32.mxu0 %v326
    %488 = vmatmul.mubr.f32.gmra.mrb[0].mxu0 %v298
    %v489 = vpop.f32.mrb[0].mxu0
    %v490 = vadd.f32 %v322, %v489
    %v491 = vpop.f32.mrb[0].mxu0
    %492 = vdwg.mxu0
    %v493 = vmax.f32 %v490, 0.0
    %v494 = vmax.f32 %v402, %v493
    %v495 = vld [vmem:[%s7] sm:$0xff]
    %v496 = vld [vmem:[%s7 + $0x8] sm:$0xff]
    %v497 = vld [vmem:[%s7 + $0x10] sm:$0xff]
    %v498 = vld [vmem:[%s7 + $0x18] sm:$0xff]
    %v499 = vld [vmem:[%s7 + $0x20] sm:$0xff]
    %v500 = vld [vmem:[%s7 + $0x28] sm:$0xff]
    %v501 = vld [vmem:[%s7 + $0x30] sm:$0xff]
    %v502 = vld [vmem:[%s7 + $0x38] sm:$0xf]
    %v503 = vld [vmem:[%s8] sm:$0x1]
    %v505 = vlaneseq
    %v506 = vshrl.u32 %v505, 7
    %v507 = vsub.s32 0, %v506
    %v508 = vrot.slane %v503, %v507
    %vm510 = vcmask 490496
    %v512 = vsel %vm510, %v494, 0
    %vm514 = vcmask 1043456
    %v516 = vsel %vm514, %v502, 0
    %518 = vmatprep.subr.mxu0 0.0
    %519 = vmatpush1.msra.mxu0 %v495
    %520 = vmatprep.subr.mxu0 0.0
    %521 = vmatpush1.msra.mxu0 %v496
    %522 = vmatprep.subr.mxu0 0.0
    %523 = vmatpush1.msra.mxu0 %v497
    %524 = vmatprep.subr.mxu0 0.0
    %525 = vmatpush1.msra.mxu0 %v498
    %526 = vmatprep.subr.mxu0 0.0
    %527 = vmatpush1.msra.mxu0 %v499
    %528 = vmatprep.subr.mxu0 0.0
    %529 = vmatpush1.msra.mxu0 %v500
    %530 = vmatprep.subr.mxu0 0.0
    %531 = vmatpush1.msra.mxu0 %v501
    %532 = vmatprep.subr.mxu0 0.0
    %533 = vmatpush1.msra.mxu0 %v516
    %534 = vmatprep.subr.mxu0 0.0
    %535 = vmatpush1.msra.mxu0 0.0
    %536 = vmatprep.subr.mxu0 0.0
    %537 = vmatpush1.msra.mxu0 0.0
    %538 = vmatprep.subr.mxu0 0.0
    %539 = vmatpush1.msra.mxu0 0.0
    %540 = vmatprep.subr.mxu0 0.0
    %541 = vmatpush1.msra.mxu0 0.0
    %542 = vmatprep.subr.mxu0 0.0
    %543 = vmatpush1.msra.mxu0 0.0
    %544 = vmatprep.subr.mxu0 0.0
    %545 = vmatpush1.msra.mxu0 0.0
    %546 = vmatprep.subr.mxu0 0.0
    %547 = vmatpush1.msra.mxu0 0.0
    %548 = vmatprep.subr.mxu0 0.0
    %549 = vmatpush1.msra.mxu0 0.0
    %550 = vmatprep.subr.mxu0 0.0
    %551 = vmatpush1.msra.mxu0 0.0
    %552 = vmatprep.subr.mxu0 0.0
    %553 = vmatpush1.msra.mxu0 0.0
    %554 = vmatprep.subr.mxu0 0.0
    %555 = vmatpush1.msra.mxu0 0.0
    %556 = vmatprep.subr.mxu0 0.0
    %557 = vmatpush1.msra.mxu0 0.0
    %558 = vmatprep.subr.mxu0 0.0
    %559 = vmatpush1.msra.mxu0 0.0
    %560 = vmatprep.subr.mxu0 0.0
    %561 = vmatpush1.msra.mxu0 0.0
    %562 = vmatprep.subr.mxu0 0.0
    %563 = vmatpush1.msra.mxu0 0.0
    %564 = vmatprep.subr.mxu0 0.0
    %565 = vmatpush1.msra.mxu0 0.0
    %566 = vmatprep.subr.mxu0 0.0
    %567 = vmatpush1.msra.mxu0 0.0
    %568 = vmatprep.subr.mxu0 0.0
    %569 = vmatpush1.msra.mxu0 0.0
    %570 = vmatprep.subr.mxu0 0.0
    %571 = vmatpush1.msra.mxu0 0.0
    %572 = vmatprep.subr.mxu0 0.0
    %573 = vmatpush1.msra.mxu0 0.0
    %574 = vmatprep.subr.mxu0 0.0
    %575 = vmatpush1.msra.mxu0 0.0
    %576 = vmatprep.subr.mxu0 0.0
    %577 = vmatpush1.msra.mxu0 0.0
    %578 = vmatprep.subr.mxu0 0.0
    %579 = vmatpush1.msra.mxu0 0.0
    %580 = vmatprep.subr.mxu0 0.0
    %581 = vmatpush1.msra.mxu0 0.0
    %582 = vmatprep.mubr.f32.mxu0 0.0
    %583 = vmatmul.mubr.f32.gmra.mrb[0].mxu0 %v512
    %v584 = vpop.f32.mrb[0].mxu0
    %v585 = vadd.f32 %v508, %v584
    %v586 = vpop.f32.mrb[0].mxu0
    %587 = vdwg.mxu0
    %v588 = vmax.f32 %v585, 0.0
    %v589 = vld [vmem:[%s9] sm:$0xff]
    %v590 = vld [vmem:[%s9 + $0x8] sm:$0xff]
    %v591 = vld [vmem:[%s9 + $0x10] sm:$0xff]
    %v592 = vld [vmem:[%s9 + $0x18] sm:$0x3f]
    %v593 = vld [vmem:[%s10] sm:$0x1]
    %v595 = vlaneseq
    %v596 = vshrl.u32 %v595, 7
    %v597 = vsub.s32 0, %v596
    %v598 = vrot.slane %v593, %v597
    %vm600 = vcmask 244736
    %v602 = vsel %vm600, %v588, 0
    %v605 = vsel %vm101, %v592, 0
    %607 = vmatprep.subr.mxu0 0.0
    %608 = vmatpush1.msra.mxu0 %v589
    %609 = vmatprep.subr.mxu0 0.0
    %610 = vmatpush1.msra.mxu0 %v590
    %611 = vmatprep.subr.mxu0 0.0
    %612 = vmatpush1.msra.mxu0 %v591
    %613 = vmatprep.subr.mxu0 0.0
    %614 = vmatpush1.msra.mxu0 %v605
    %615 = vmatprep.subr.mxu0 0.0
    %616 = vmatpush1.msra.mxu0 0.0
    %617 = vmatprep.subr.mxu0 0.0
    %618 = vmatpush1.msra.mxu0 0.0
    %619 = vmatprep.subr.mxu0 0.0
    %620 = vmatpush1.msra.mxu0 0.0
    %621 = vmatprep.subr.mxu0 0.0
    %622 = vmatpush1.msra.mxu0 0.0
    %623 = vmatprep.subr.mxu0 0.0
    %624 = vmatpush1.msra.mxu0 0.0
    %625 = vmatprep.subr.mxu0 0.0
    %626 = vmatpush1.msra.mxu0 0.0
    %627 = vmatprep.subr.mxu0 0.0
    %628 = vmatpush1.msra.mxu0 0.0
    %629 = vmatprep.subr.mxu0 0.0
    %630 = vmatpush1.msra.mxu0 0.0
    %631 = vmatprep.subr.mxu0 0.0
    %632 = vmatpush1.msra.mxu0 0.0
    %633 = vmatprep.subr.mxu0 0.0
    %634 = vmatpush1.msra.mxu0 0.0
    %635 = vmatprep.subr.mxu0 0.0
    %636 = vmatpush1.msra.mxu0 0.0
    %637 = vmatprep.subr.mxu0 0.0
    %638 = vmatpush1.msra.mxu0 0.0
    %639 = vmatprep.subr.mxu0 0.0
    %640 = vmatpush1.msra.mxu0 0.0
    %641 = vmatprep.subr.mxu0 0.0
    %642 = vmatpush1.msra.mxu0 0.0
    %643 = vmatprep.subr.mxu0 0.0
    %644 = vmatpush1.msra.mxu0 0.0
    %645 = vmatprep.subr.mxu0 0.0
    %646 = vmatpush1.msra.mxu0 0.0
    %647 = vmatprep.subr.mxu0 0.0
    %648 = vmatpush1.msra.mxu0 0.0
    %649 = vmatprep.subr.mxu0 0.0
    %650 = vmatpush1.msra.mxu0 0.0
    %651 = vmatprep.subr.mxu0 0.0
    %652 = vmatpush1.msra.mxu0 0.0
    %653 = vmatprep.subr.mxu0 0.0
    %654 = vmatpush1.msra.mxu0 0.0
    %655 = vmatprep.subr.mxu0 0.0
    %656 = vmatpush1.msra.mxu0 0.0
    %657 = vmatprep.subr.mxu0 0.0
    %658 = vmatpush1.msra.mxu0 0.0
    %659 = vmatprep.subr.mxu0 0.0
    %660 = vmatpush1.msra.mxu0 0.0
    %661 = vmatprep.subr.mxu0 0.0
    %662 = vmatpush1.msra.mxu0 0.0
    %663 = vmatprep.subr.mxu0 0.0
    %664 = vmatpush1.msra.mxu0 0.0
    %665 = vmatprep.subr.mxu0 0.0
    %666 = vmatpush1.msra.mxu0 0.0
    %667 = vmatprep.subr.mxu0 0.0
    %668 = vmatpush1.msra.mxu0 0.0
    %669 = vmatprep.subr.mxu0 0.0
    %670 = vmatpush1.msra.mxu0 0.0
    %671 = vmatprep.mubr.f32.mxu0 0.0
    %672 = vmatmul.mubr.f32.gmra.mrb[0].mxu0 %v602
    %v673 = vpop.f32.mrb[0].mxu0
    %v674 = vadd.f32 %v598, %v673
    %v675 = vpop.f32.mrb[0].mxu0
    %676 = vdwg.mxu0
    %v677 = vmax.f32 %v674, 0.0
    %v678 = vld [vmem:[%s11] sm:$0xff]
    %v679 = vld [vmem:[%s11 + $0x8] sm:$0x3]
    %v680 = vld [vmem:[%s12] sm:$0x1]
    %v682 = vlaneseq
    %v683 = vshrl.u32 %v682, 7
    %v684 = vsub.s32 0, %v683
    %v685 = vrot.slane %v680, %v684
    %vm687 = vcmask 80896
    %v689 = vsel %vm687, %v677, 0
    %v692 = vsel %vm328, %v679, 0
    %694 = vmatprep.subr.mxu0 0.0
    %695 = vmatpush1.msra.mxu0 %v678
    %696 = vmatprep.subr.mxu0 0.0
    %697 = vmatpush1.msra.mxu0 %v692
    %698 = vmatprep.subr.mxu0 0.0
    %699 = vmatpush1.msra.mxu0 0.0
    %700 = vmatprep.subr.mxu0 0.0
    %701 = vmatpush1.msra.mxu0 0.0
    %702 = vmatprep.subr.mxu0 0.0
    %703 = vmatpush1.msra.mxu0 0.0
    %704 = vmatprep.subr.mxu0 0.0
    %705 = vmatpush1.msra.mxu0 0.0
    %706 = vmatprep.subr.mxu0 0.0
    %707 = vmatpush1.msra.mxu0 0.0
    %708 = vmatprep.subr.mxu0 0.0
    %709 = vmatpush1.msra.mxu0 0.0
    %710 = vmatprep.subr.mxu0 0.0
    %711 = vmatpush1.msra.mxu0 0.0
    %712 = vmatprep.subr.mxu0 0.0
    %713 = vmatpush1.msra.mxu0 0.0
    %714 = vmatprep.subr.mxu0 0.0
    %715 = vmatpush1.msra.mxu0 0.0
    %716 = vmatprep.subr.mxu0 0.0
    %717 = vmatpush1.msra.mxu0 0.0
    %718 = vmatprep.subr.mxu0 0.0
    %719 = vmatpush1.msra.mxu0 0.0
    %720 = vmatprep.subr.mxu0 0.0
    %721 = vmatpush1.msra.mxu0 0.0
    %722 = vmatprep.subr.mxu0 0.0
    %723 = vmatpush1.msra.mxu0 0.0
    %724 = vmatprep.subr.mxu0 0.0
    %725 = vmatpush1.msra.mxu0 0.0
    %726 = vmatprep.subr.mxu0 0.0
    %727 = vmatpush1.msra.mxu0 0.0
    %728 = vmatprep.subr.mxu0 0.0
    %729 = vmatpush1.msra.mxu0 0.0
    %730 = vmatprep.subr.mxu0 0.0
    %731 = vmatpush1.msra.mxu0 0.0
    %732 = vmatprep.subr.mxu0 0.0
    %733 = vmatpush1.msra.mxu0 0.0
    %734 = vmatprep.subr.mxu0 0.0
    %735 = vmatpush1.msra.mxu0 0.0
    %736 = vmatprep.subr.mxu0 0.0
    %737 = vmatpush1.msra.mxu0 0.0
    %738 = vmatprep.subr.mxu0 0.0
    %739 = vmatpush1.msra.mxu0 0.0
    %740 = vmatprep.subr.mxu0 0.0
    %741 = vmatpush1.msra.mxu0 0.0
    %742 = vmatprep.subr.mxu0 0.0
    %743 = vmatpush1.msra.mxu0 0.0
    %744 = vmatprep.subr.mxu0 0.0
    %745 = vmatpush1.msra.mxu0 0.0
    %746 = vmatprep.subr.mxu0 0.0
    %747 = vmatpush1.msra.mxu0 0.0
    %748 = vmatprep.subr.mxu0 0.0
    %749 = vmatpush1.msra.mxu0 0.0
    %750 = vmatprep.subr.mxu0 0.0
    %751 = vmatpush1.msra.mxu0 0.0
    %752 = vmatprep.subr.mxu0 0.0
    %753 = vmatpush1.msra.mxu0 0.0
    %754 = vmatprep.subr.mxu0 0.0
    %755 = vmatpush1.msra.mxu0 0.0
    %756 = vmatprep.subr.mxu0 0.0
    %757 = vmatpush1.msra.mxu0 0.0
    %758 = vmatprep.mubr.f32.mxu0 0.0
    %759 = vmatmul.mubr.f32.gmra.mrb[0].mxu0 %v689
    %v760 = vpop.f32.mrb[0].mxu0
    %v761 = vadd.f32 %v685, %v760
    %v762 = vpop.f32.mrb[0].mxu0
    %763 = vdwg.mxu0
    %764 = vst [vmem:[#allocation2] sm:$0xff] %v761
    // Predicated region
    $region54: #{tpu_custom_call.1} parent=1 // pred_check
      _
    $region55: #{tpu_custom_call.1} parent=1 // pred_check_branch
      %766 = sbr.rel (0) target = $region57
    $region56: #{tpu_custom_call.1} parent=1 // pred_region
      %s768 = ssub.s32 128, 128
      %769 = vsyncadd [#allocation3], %s768
      %s771 = sshll.u32 [#allocation2], 4
      %s772 = int_to_ptr.vmem [resolvable:$true] %s771
      %774 = dma.vmem_to_hbm [thread:$0]  %s772, 128, %s13, [#allocation3]
    $region57: #{tpu_custom_call.1} parent=1 // pred_fallthru
      _
    // Predicated region
    $region58: #{tpu_custom_call.1} parent=1 // pred_check
      _
    $region59: #{tpu_custom_call.1} parent=1 // pred_check_branch
      %776 = sbr.rel (0) target = $region61
    $region60: #{tpu_custom_call.1} parent=1 // pred_region
      %777 = dma.done [#allocation3], 128
    $region61: #{tpu_custom_call.1} parent=1 // pred_fallthru
      _
    %778 = vsyncpa [#allocation3], 1

</llo_original>
